<compile_context>
chip_gen: v5e
topology: v5e:2x2
jax: 0.10.0
libtpu: 0.0.40
codegen_flags: <defaults>
</compile_context>

<pallas_src>
import functools

import jax
import jax.numpy as jnp
from jax import lax
from jax.experimental import pallas as pl
from jax.experimental.pallas import tpu as pltpu

LOG_SIG_MIN = -20.0
LOG_SIG_MAX = 2.0

_TB_MAX = 2048          # max batch rows per grid step
_SINGLE_STEP_MAX = 256  # above this, keep >=2 steps so v7x can dual-TC shard


def _round_up(x, m):
    return ((x + m - 1) // m) * m


def _policy_head_kernel(z_ref, w1_ref, b1_ref, w2_ref, b2_ref, w3_ref, b3_ref,
                        lo_ref, hi_ref, out_ref):
    # z_ref: (TB, z_dim); wN_ref: (in, out); bN/lo/hi: (1, out); out_ref: (TB, OUT_W)
    z = z_ref[...]

    h1 = jnp.dot(z, w1_ref[...], preferred_element_type=jnp.float32) + b1_ref[...]
    h1 = jnp.maximum(h1, 0.0)                       # ConvBlock ReLU

    h2 = jnp.dot(h1, w2_ref[...], preferred_element_type=jnp.float32) + b2_ref[...]
    h2 = jnp.maximum(h2, 0.0)                       # ConvBlock ReLU

    out = jnp.dot(h2, w3_ref[...], preferred_element_type=jnp.float32) + b3_ref[...]

    # Per-column clamp: lo/hi are (-inf, +inf) over the mean half and
    # (LOG_SIG_MIN, LOG_SIG_MAX) over the log_std half.
    out_ref[...] = jnp.minimum(jnp.maximum(out, lo_ref[...]),
                               hi_ref[...]).astype(out_ref.dtype)


def prepare_params(params):
    """One-time parameter prep (hoisted out of the per-call path).

    params: (w1, b1, w2, b2, w3, b3) with conv-style weights wN of shape
            (out, in) or (out, in, 1, 1) and biases bN of shape (out,).
    returns: (w1t, b1r, w2t, b2r, w3p, b3p, lo, hi) with (in, out) weights,
             (1, out) biases, and the last layer padded to a lane-dense
             2*HALF_W output slab: mean at cols [0:A], log_std at
             cols [HALF_W:HALF_W+A], plus per-column clamp bounds.
    """
    w1, b1, w2, b2, w3, b3 = params

    def wt(w):
        w = jnp.asarray(w, jnp.float32)
        if w.ndim == 4:                          # (out, in, 1, 1) conv weight
            w = w.reshape(w.shape[0], w.shape[1])
        return w.T                               # -> (in, out)

    def br(b):
        return jnp.asarray(b, jnp.float32).reshape(1, -1)

    w1t, b1r = wt(w1), br(b1)
    w2t, b2r = wt(w2), br(b2)
    w3t, b3r = wt(w3), br(b3)                    # (in, 2A), (1, 2A)

    two_a = w3t.shape[1]
    a = two_a // 2
    half_w = _round_up(max(a, 1), 128)           # lane-aligned half width (>=128)
    out_w = 2 * half_w
    k3 = w3t.shape[0]

    w3p = jnp.zeros((k3, out_w), jnp.float32)
    w3p = w3p.at[:, :a].set(w3t[:, :a])                      # mean weights
    w3p = w3p.at[:, half_w:half_w + a].set(w3t[:, a:])       # log_std weights

    b3p = jnp.zeros((1, out_w), jnp.float32)
    b3p = b3p.at[:, :a].set(b3r[:, :a])
    b3p = b3p.at[:, half_w:half_w + a].set(b3r[:, a:])

    col = jnp.arange(out_w)
    lo = jnp.where(col >= half_w, LOG_SIG_MIN, -jnp.inf).astype(jnp.float32).reshape(1, out_w)
    hi = jnp.where(col >= half_w, LOG_SIG_MAX, jnp.inf).astype(jnp.float32).reshape(1, out_w)

    return (w1t, b1r, w2t, b2r, w3p, b3p, lo, hi)


@functools.partial(jax.jit, static_argnames=("action_dim", "min_pallas_batch"))
def gaussian_policy_forward(z_nchw, prepared, *, action_dim, min_pallas_batch=8):
    """Non-equivariant GaussianPolicy.forward given the encoder latent z.

    z_nchw:   (B, z_dim, 1, 1) float32 (NCHW, matching the PyTorch encoder)
    prepared: output of prepare_params(...)
    returns:  (mean, log_std), each (B, action_dim)
    """
    w1t, b1r, w2t, b2r, w3p, b3p, lo, hi = prepared

    B = z_nchw.shape[0]
    z = z_nchw.reshape(B, -1).astype(jnp.float32)            # (B, z_dim)
    z_dim = z.shape[1]
    out_w = w3p.shape[1]
    half_w = out_w // 2
    a = action_dim

    if B < min_pallas_batch:
        # Tiny-batch inference: a standalone pallas_call launch dominates at
        # ~11 kFLOP.  Plain jnp lets XLA fuse the head into the surrounding
        # graph with no extra HBM round trips.
        hp = lax.Precision.HIGHEST
        h1 = jnp.maximum(jnp.dot(z, w1t, precision=hp) + b1r, 0.0)
        h2 = jnp.maximum(jnp.dot(h1, w2t, precision=hp) + b2r, 0.0)
        out = jnp.dot(h2, w3p, precision=hp) + b3p
        mean = out[:, :a]
        log_std = jnp.clip(out[:, half_w:half_w + a], LOG_SIG_MIN, LOG_SIG_MAX)
        return mean, log_std

    # --- Tiling ------------------------------------------------------------
    # Per-step pipeline overhead (~0.35 us) dominates this head, so use as few
    # grid steps as possible; but keep >=2 steps for B > _SINGLE_STEP_MAX so
    # the "parallel" batch axis can shard across v7x's two TensorCores.
    if B <= _SINGLE_STEP_MAX:
        nsteps = 1
    else:
        nsteps = max(2, -(-B // _TB_MAX))
    TB = _round_up(-(-B // nsteps), 8)           # f32 sublane multiple
    Bp = TB * nsteps
    if Bp != B:
        z = jnp.pad(z, ((0, Bp - B), (0, 0)))

    def const_spec(shape):
        # Constant, VMEM-resident block: same block every grid step, single
        # buffered (no useless second pipeline buffer).
        return pl.BlockSpec(shape, lambda i: (0, 0),
                            pipeline_mode=pl.Buffered(buffer_count=1))

    grid_spec = pltpu.PrefetchScalarGridSpec(
        num_scalar_prefetch=0,
        grid=(nsteps,),
        in_specs=[
            pl.BlockSpec((TB, z_dim), lambda i: (i, 0)),
            const_spec(w1t.shape), const_spec(b1r.shape),
            const_spec(w2t.shape), const_spec(b2r.shape),
            const_spec(w3p.shape), const_spec(b3p.shape),
            const_spec(lo.shape), const_spec(hi.shape),
        ],
        out_specs=pl.BlockSpec((TB, out_w), lambda i: (i, 0)),
    )

    out = pl.pallas_call(
        _policy_head_kernel,
        out_shape=jax.ShapeDtypeStruct((Bp, out_w), jnp.float32),
        grid_spec=grid_spec,
        compiler_params=pltpu.CompilerParams(
            dimension_semantics=("parallel",),
            vmem_limit_bytes=32 * 1024 * 1024),
    )(z, w1t, b1r, w2t, b2r, w3p, b3p, lo, hi)

    # Both slices start at lane-aligned column offsets (0 and half_w=128k).
    mean = out[:B, :a]
    log_std = out[:B, half_w:half_w + a]
    return mean, log_std


def _reference_forward(z_nchw, params):
    """Pure-JAX reference mirroring the PyTorch forward (non-equivariant path)."""
    hp = lax.Precision.HIGHEST
    B = z_nchw.shape[0]
    z = z_nchw.reshape(B, -1)
    w1, b1, w2, b2, w3, b3 = params
    h1 = jnp.maximum(jnp.dot(z, w1.T, precision=hp) + b1, 0.0)
    h2 = jnp.maximum(jnp.dot(h1, w2.T, precision=hp) + b2, 0.0)
    out = jnp.dot(h2, w3.T, precision=hp) + b3
    half = out.shape[1] // 2
    mean = out[:, :half]
    log_std = jnp.clip(out[:, half:], LOG_SIG_MIN, LOG_SIG_MAX)
    return mean, log_std


if __name__ == "__main__":
    # Small shapes consistent with the module: z_dim=64, action_dim=5, batch=2.
    B, z_dim, action_dim = 2, 64, 5

    key = jax.random.PRNGKey(0)
    ks = jax.random.split(key, 7)

    # Deterministic synthetic parameters (conv-style (out, in) weights + biases),
    # standing in for torch_utils.initWeights.
    def w_init(k, out_c, in_c):
        return jax.random.normal(k, (out_c, in_c), jnp.float32) * (1.0 / jnp.sqrt(in_c))

    w1 = w_init(ks[0], z_dim // 2, z_dim)
    b1 = jax.random.normal(ks[1], (z_dim // 2,), jnp.float32) * 0.01
    w2 = w_init(ks[2], z_dim // 4, z_dim // 2)
    b2 = jax.random.normal(ks[3], (z_dim // 4,), jnp.float32) * 0.01
    w3 = w_init(ks[4], action_dim * 2, z_dim // 4)
    b3 = jax.random.normal(ks[5], (action_dim * 2,), jnp.float32) * 0.01
    params = (w1, b1, w2, b2, w3, b3)

    # One-time parameter prep (transposes / output padding / clamp bounds).
    prepared = prepare_params(params)

    # Encoder latent (NCHW, spatial 1x1) as produced by Latent(obs).
    z = jax.random.normal(ks[6], (B, z_dim, 1, 1), jnp.float32)

    # Tolerance covers MXU f32-emulation vs HIGHEST-precision XLA reference.
    ATOL = RTOL = 5e-3

    # 1) Force the Pallas kernel even at B=2 to exercise it end-to-end.
    mean, log_std = gaussian_policy_forward(z, prepared, action_dim=action_dim,
                                            min_pallas_batch=1)
    jax.block_until_ready((mean, log_std))
    ref_mean, ref_log_std = _reference_forward(z, params)
    assert mean.shape == (B, action_dim) and log_std.shape == (B, action_dim)
    assert jnp.allclose(mean, ref_mean, atol=ATOL, rtol=RTOL)
    assert jnp.allclose(log_std, ref_log_std, atol=ATOL, rtol=RTOL)

    # 2) Default tiny-batch path (plain jnp, no standalone pallas_call).
    m_s, s_s = gaussian_policy_forward(z, prepared, action_dim=action_dim)
    jax.block_until_ready((m_s, s_s))
    assert jnp.allclose(m_s, ref_mean, atol=ATOL, rtol=RTOL)
    assert jnp.allclose(s_s, ref_log_std, atol=ATOL, rtol=RTOL)

    # 3) Larger batch: 2 parallel grid steps (260 -> 2 x 136 = 272 padded rows).
    B2 = 260
    z2 = jax.random.normal(jax.random.PRNGKey(1), (B2, z_dim, 1, 1), jnp.float32)
    m2, s2 = gaussian_policy_forward(z2, prepared, action_dim=action_dim)
    jax.block_until_ready((m2, s2))
    rm2, rs2 = _reference_forward(z2, params)
    assert m2.shape == (B2, action_dim) and s2.shape == (B2, action_dim)
    assert jnp.allclose(m2, rm2, atol=ATOL, rtol=RTOL)
    assert jnp.allclose(s2, rs2, atol=ATOL, rtol=RTOL)

    print("KERNEL_OK")
</pallas_src>

<mosaic_0001>
module attributes {stable_mosaic.version = 11 : i64} {
  func.func @_policy_head_kernel(%arg0: i32, %arg1: memref<8x64xf32, #tpu.memory_space<vmem>>, %arg2: memref<64x32xf32, #tpu.memory_space<vmem>>, %arg3: memref<1x32xf32, #tpu.memory_space<vmem>>, %arg4: memref<32x16xf32, #tpu.memory_space<vmem>>, %arg5: memref<1x16xf32, #tpu.memory_space<vmem>>, %arg6: memref<16x256xf32, #tpu.memory_space<vmem>>, %arg7: memref<1x256xf32, #tpu.memory_space<vmem>>, %arg8: memref<1x256xf32, #tpu.memory_space<vmem>>, %arg9: memref<1x256xf32, #tpu.memory_space<vmem>>, %arg10: memref<8x256xf32, #tpu.memory_space<vmem>>) attributes {dimension_semantics = [#tpu.dimension_semantics<parallel>], iteration_bounds = array<i64: 1>, scalar_prefetch = 0 : i64, scratch_operands = 0 : i64, tpu.core_type = #tpu.core_type<tc>, window_params = [{transform_indices = @transform_0, window_bounds = array<i64: 8, 64>}, {pipeline_mode = #tpu.pipeline_mode<synchronous>, transform_indices = @transform_1, window_bounds = array<i64: 64, 32>}, {pipeline_mode = #tpu.pipeline_mode<synchronous>, transform_indices = @transform_2, window_bounds = array<i64: 1, 32>}, {pipeline_mode = #tpu.pipeline_mode<synchronous>, transform_indices = @transform_3, window_bounds = array<i64: 32, 16>}, {pipeline_mode = #tpu.pipeline_mode<synchronous>, transform_indices = @transform_4, window_bounds = array<i64: 1, 16>}, {pipeline_mode = #tpu.pipeline_mode<synchronous>, transform_indices = @transform_5, window_bounds = array<i64: 16, 256>}, {pipeline_mode = #tpu.pipeline_mode<synchronous>, transform_indices = @transform_6, window_bounds = array<i64: 1, 256>}, {pipeline_mode = #tpu.pipeline_mode<synchronous>, transform_indices = @transform_7, window_bounds = array<i64: 1, 256>}, {pipeline_mode = #tpu.pipeline_mode<synchronous>, transform_indices = @transform_8, window_bounds = array<i64: 1, 256>}, {transform_indices = @transform_9, window_bounds = array<i64: 8, 256>}]} {
    %c0 = arith.constant 0 : index
    %c0_0 = arith.constant 0 : index
    %0 = vector.load %arg1[%c0, %c0_0] : memref<8x64xf32, #tpu.memory_space<vmem>>, vector<8x64xf32>
    %c0_1 = arith.constant 0 : index
    %c0_2 = arith.constant 0 : index
    %1 = vector.load %arg2[%c0_1, %c0_2] : memref<64x32xf32, #tpu.memory_space<vmem>>, vector<64x32xf32>
    %cst = arith.constant dense<0.000000e+00> : vector<8x32xf32>
    %2 = tpu.matmul %0, %1, %cst {dimension_numbers = #tpu.dot_dimension_numbers<[1], [0], [0], [1], [0, 0, 1, 1], [], []>} : vector<8x64xf32>, vector<64x32xf32>, vector<8x32xf32> -> vector<8x32xf32>
    %c0_3 = arith.constant 0 : index
    %c0_4 = arith.constant 0 : index
    %3 = vector.load %arg3[%c0_3, %c0_4] : memref<1x32xf32, #tpu.memory_space<vmem>>, vector<1x32xf32>
    %4 = vector.broadcast %3 : vector<1x32xf32> to vector<8x32xf32>
    %5 = arith.addf %2, %4 : vector<8x32xf32>
    %cst_5 = arith.constant 0.000000e+00 : f32
    %6 = vector.broadcast %cst_5 : f32 to vector<8x32xf32>
    %7 = arith.maximumf %5, %6 : vector<8x32xf32>
    %c0_6 = arith.constant 0 : index
    %c0_7 = arith.constant 0 : index
    %8 = vector.load %arg4[%c0_6, %c0_7] : memref<32x16xf32, #tpu.memory_space<vmem>>, vector<32x16xf32>
    %cst_8 = arith.constant dense<0.000000e+00> : vector<8x16xf32>
    %9 = tpu.matmul %7, %8, %cst_8 {dimension_numbers = #tpu.dot_dimension_numbers<[1], [0], [0], [1], [0, 0, 1, 1], [], []>} : vector<8x32xf32>, vector<32x16xf32>, vector<8x16xf32> -> vector<8x16xf32>
    %c0_9 = arith.constant 0 : index
    %c0_10 = arith.constant 0 : index
    %10 = vector.load %arg5[%c0_9, %c0_10] : memref<1x16xf32, #tpu.memory_space<vmem>>, vector<1x16xf32>
    %11 = vector.broadcast %10 : vector<1x16xf32> to vector<8x16xf32>
    %12 = arith.addf %9, %11 : vector<8x16xf32>
    %cst_11 = arith.constant 0.000000e+00 : f32
    %13 = vector.broadcast %cst_11 : f32 to vector<8x16xf32>
    %14 = arith.maximumf %12, %13 : vector<8x16xf32>
    %c0_12 = arith.constant 0 : index
    %c0_13 = arith.constant 0 : index
    %15 = vector.load %arg6[%c0_12, %c0_13] : memref<16x256xf32, #tpu.memory_space<vmem>>, vector<16x256xf32>
    %cst_14 = arith.constant dense<0.000000e+00> : vector<8x256xf32>
    %16 = tpu.matmul %14, %15, %cst_14 {dimension_numbers = #tpu.dot_dimension_numbers<[1], [0], [0], [1], [0, 0, 1, 1], [], []>} : vector<8x16xf32>, vector<16x256xf32>, vector<8x256xf32> -> vector<8x256xf32>
    %c0_15 = arith.constant 0 : index
    %c0_16 = arith.constant 0 : index
    %17 = vector.load %arg7[%c0_15, %c0_16] : memref<1x256xf32, #tpu.memory_space<vmem>>, vector<1x256xf32>
    %18 = vector.broadcast %17 : vector<1x256xf32> to vector<8x256xf32>
    %19 = arith.addf %16, %18 : vector<8x256xf32>
    %c0_17 = arith.constant 0 : index
    %c0_18 = arith.constant 0 : index
    %20 = vector.load %arg8[%c0_17, %c0_18] : memref<1x256xf32, #tpu.memory_space<vmem>>, vector<1x256xf32>
    %21 = vector.broadcast %20 : vector<1x256xf32> to vector<8x256xf32>
    %22 = arith.maximumf %19, %21 : vector<8x256xf32>
    %c0_19 = arith.constant 0 : index
    %c0_20 = arith.constant 0 : index
    %23 = vector.load %arg9[%c0_19, %c0_20] : memref<1x256xf32, #tpu.memory_space<vmem>>, vector<1x256xf32>
    %24 = vector.broadcast %23 : vector<1x256xf32> to vector<8x256xf32>
    %25 = arith.minimumf %22, %24 : vector<8x256xf32>
    %c0_21 = arith.constant 0 : index
    %c0_22 = arith.constant 0 : index
    %26 = vector.load %arg10[%c0_21, %c0_22] : memref<8x256xf32, #tpu.memory_space<vmem>>, vector<8x256xf32>
    tpu.vector_store %arg10[%c0_21, %c0_22], %25 {strides = array<i32>} : memref<8x256xf32, #tpu.memory_space<vmem>>, vector<8x256xf32>,
    return
  }
  func.func @transform_0(%arg0: i32) -> (i32, i32) {
    %c0_i32 = arith.constant 0 : i32
    %c0_i32_0 = arith.constant 0 : i32
    return %arg0, %c0_i32 : i32, i32
  }
  func.func @transform_1(%arg0: i32) -> (i32, i32) {
    %c0_i32 = arith.constant 0 : i32
    %c0_i32_0 = arith.constant 0 : i32
    %c0_i32_1 = arith.constant 0 : i32
    return %c0_i32, %c0_i32_0 : i32, i32
  }
  func.func @transform_2(%arg0: i32) -> (i32, i32) {
    %c0_i32 = arith.constant 0 : i32
    %c0_i32_0 = arith.constant 0 : i32
    %c0_i32_1 = arith.constant 0 : i32
    return %c0_i32, %c0_i32_0 : i32, i32
  }
  func.func @transform_3(%arg0: i32) -> (i32, i32) {
    %c0_i32 = arith.constant 0 : i32
    %c0_i32_0 = arith.constant 0 : i32
    %c0_i32_1 = arith.constant 0 : i32
    return %c0_i32, %c0_i32_0 : i32, i32
  }
  func.func @transform_4(%arg0: i32) -> (i32, i32) {
    %c0_i32 = arith.constant 0 : i32
    %c0_i32_0 = arith.constant 0 : i32
    %c0_i32_1 = arith.constant 0 : i32
    return %c0_i32, %c0_i32_0 : i32, i32
  }
  func.func @transform_5(%arg0: i32) -> (i32, i32) {
    %c0_i32 = arith.constant 0 : i32
    %c0_i32_0 = arith.constant 0 : i32
    %c0_i32_1 = arith.constant 0 : i32
    return %c0_i32, %c0_i32_0 : i32, i32
  }
  func.func @transform_6(%arg0: i32) -> (i32, i32) {
    %c0_i32 = arith.constant 0 : i32
    %c0_i32_0 = arith.constant 0 : i32
    %c0_i32_1 = arith.constant 0 : i32
    return %c0_i32, %c0_i32_0 : i32, i32
  }
  func.func @transform_7(%arg0: i32) -> (i32, i32) {
    %c0_i32 = arith.constant 0 : i32
    %c0_i32_0 = arith.constant 0 : i32
    %c0_i32_1 = arith.constant 0 : i32
    return %c0_i32, %c0_i32_0 : i32, i32
  }
  func.func @transform_8(%arg0: i32) -> (i32, i32) {
    %c0_i32 = arith.constant 0 : i32
    %c0_i32_0 = arith.constant 0 : i32
    %c0_i32_1 = arith.constant 0 : i32
    return %c0_i32, %c0_i32_0 : i32, i32
  }
  func.func @transform_9(%arg0: i32) -> (i32, i32) {
    %c0_i32 = arith.constant 0 : i32
    %c0_i32_0 = arith.constant 0 : i32
    return %arg0, %c0_i32 : i32, i32
  }
}

</mosaic_0001>

<llo_original>
// kernel: gaussian_policy_forward.1
$region0: #{gaussian_policy_forward.1}
  #allocation0 [shape = 'u32[]', space=smem, size = 0x4, offset = 0x4, fixed_abs, tag = 'smem constant byte address 0x4 - core index']
  #allocation1 [shape = 'u32[72,128]{1,0:T(1,128)}', space=vmem, size = 0x9000, scoped, tag = 'internal scratch']
  %s0 = inlined_call_operand.vmem [shape: f32[8,64], index: 0, kind: input, shape index: {}]
  %s1 = inlined_call_operand.vmem [shape: f32[64,32], index: 1, kind: input, shape index: {}]
  %s2 = inlined_call_operand.vmem [shape: f32[1,32], index: 2, kind: input, shape index: {}]
  %s3 = inlined_call_operand.vmem [shape: f32[32,16], index: 3, kind: input, shape index: {}]
  %s4 = inlined_call_operand.vmem [shape: f32[1,16], index: 4, kind: input, shape index: {}]
  %s5 = inlined_call_operand.vmem [shape: f32[16,256], index: 5, kind: input, shape index: {}]
  %s6 = inlined_call_operand.vmem [shape: f32[1,256], index: 6, kind: input, shape index: {}]
  %s7 = inlined_call_operand.vmem [shape: f32[1,256], index: 7, kind: input, shape index: {}]
  %s8 = inlined_call_operand.vmem [shape: f32[1,256], index: 8, kind: input, shape index: {}]
  %s9 = inlined_call_operand.vmem [shape: f32[8,256], index: 9, kind: output, shape index: {}]
  %s10 = sld [smem:[#allocation0]]
  $region46: #{gaussian_policy_forward.1} parent=0
    _
  %s12 = ssub.s32 1, %s10
  %s13 = scalar_select 0, %s12, %s10
  // Predicated region
  $region2: #{gaussian_policy_forward.1} parent=0 // pred_check
    _
  $region3: #{gaussian_policy_forward.1} parent=0 // pred_check_branch
    %15 = sbr.rel (0) target = $region5
  $region4: #{gaussian_policy_forward.1} parent=0 // pred_region
    _
  $region5: #{gaussian_policy_forward.1} parent=0 // pred_fallthru
    _
  // Predicated region
  $region6: #{gaussian_policy_forward.1} parent=0 // pred_check
    _
  $region7: #{gaussian_policy_forward.1} parent=0 // pred_check_branch
    %17 = sbr.rel (0) target = $region9
  $region8: #{gaussian_policy_forward.1} parent=0 // pred_region
    _
  $region9: #{gaussian_policy_forward.1} parent=0 // pred_fallthru
    _
  // Predicated region
  $region10: #{gaussian_policy_forward.1} parent=0 // pred_check
    _
  $region11: #{gaussian_policy_forward.1} parent=0 // pred_check_branch
    %19 = sbr.rel (0) target = $region13
  $region12: #{gaussian_policy_forward.1} parent=0 // pred_region
    _
  $region13: #{gaussian_policy_forward.1} parent=0 // pred_fallthru
    _
  // Predicated region
  $region14: #{gaussian_policy_forward.1} parent=0 // pred_check
    _
  $region15: #{gaussian_policy_forward.1} parent=0 // pred_check_branch
    %21 = sbr.rel (0) target = $region17
  $region16: #{gaussian_policy_forward.1} parent=0 // pred_region
    _
  $region17: #{gaussian_policy_forward.1} parent=0 // pred_fallthru
    _
  // Predicated region
  $region18: #{gaussian_policy_forward.1} parent=0 // pred_check
    _
  $region19: #{gaussian_policy_forward.1} parent=0 // pred_check_branch
    %23 = sbr.rel (0) target = $region21
  $region20: #{gaussian_policy_forward.1} parent=0 // pred_region
    _
  $region21: #{gaussian_policy_forward.1} parent=0 // pred_fallthru
    _
  // Predicated region
  $region22: #{gaussian_policy_forward.1} parent=0 // pred_check
    _
  $region23: #{gaussian_policy_forward.1} parent=0 // pred_check_branch
    %25 = sbr.rel (0) target = $region25
  $region24: #{gaussian_policy_forward.1} parent=0 // pred_region
    _
  $region25: #{gaussian_policy_forward.1} parent=0 // pred_fallthru
    _
  // Predicated region
  $region26: #{gaussian_policy_forward.1} parent=0 // pred_check
    _
  $region27: #{gaussian_policy_forward.1} parent=0 // pred_check_branch
    %27 = sbr.rel (0) target = $region29
  $region28: #{gaussian_policy_forward.1} parent=0 // pred_region
    _
  $region29: #{gaussian_policy_forward.1} parent=0 // pred_fallthru
    _
  // Predicated region
  $region30: #{gaussian_policy_forward.1} parent=0 // pred_check
    _
  $region31: #{gaussian_policy_forward.1} parent=0 // pred_check_branch
    %29 = sbr.rel (0) target = $region33
  $region32: #{gaussian_policy_forward.1} parent=0 // pred_region
    _
  $region33: #{gaussian_policy_forward.1} parent=0 // pred_fallthru
    _
  // Predicated region
  $region34: #{gaussian_policy_forward.1} parent=0 // pred_check
    _
  $region35: #{gaussian_policy_forward.1} parent=0 // pred_check_branch
    %31 = sbr.rel (0) target = $region37
  $region36: #{gaussian_policy_forward.1} parent=0 // pred_region
    _
  $region37: #{gaussian_policy_forward.1} parent=0 // pred_fallthru
    _
  %v32 = vld [vmem:[%s0] sm:$0xff]
  %v33 = vld [vmem:[%s1] sm:$0xff]
  %v34 = vld [vmem:[%s1 + $0x8] sm:$0xff]
  %v35 = vld [vmem:[%s1 + $0x10] sm:$0xff]
  %v36 = vld [vmem:[%s1 + $0x18] sm:$0xff]
  %v37 = vld [vmem:[%s1 + $0x20] sm:$0xff]
  %v38 = vld [vmem:[%s1 + $0x28] sm:$0xff]
  %v39 = vld [vmem:[%s1 + $0x30] sm:$0xff]
  %v40 = vld [vmem:[%s1 + $0x38] sm:$0xff]
  %v41 = vld [vmem:[%s2] sm:$0x1]
  %v43 = vperm.slane %v41, 0
  %vm45 = vcmask 523264
  %v47 = vsel %vm45, %v32, 0
  %49 = vmatpush.msra.mxu0 0.0
  %50 = vmatpush.msra.mxu0 0.0
  %51 = vmatpush.msra.mxu0 0.0
  %52 = vmatpush.msra.mxu0 0.0
  %53 = vmatpush.msra.mxu0 0.0
  %54 = vmatpush.msra.mxu0 0.0
  %55 = vmatpush.msra.mxu0 0.0
  %56 = vmatpush.msra.mxu0 0.0
  %57 = vmatpush.msra.mxu0 %v40
  %58 = vmatpush.msra.mxu0 %v39
  %59 = vmatpush.msra.mxu0 %v38
  %60 = vmatpush.msra.mxu0 %v37
  %61 = vmatpush.msra.mxu0 %v36
  %62 = vmatpush.msra.mxu0 %v35
  %63 = vmatpush.msra.mxu0 %v34
  %64 = vmatpush.msra.mxu0 %v33
  %65 = vmatmul.f32.gmra.mxu0 %v47
  %v66 = vpop.f32.mrf.mxu0
  %v67 = vadd.f32 %v43, %v66
  %68 = vdwg.mxu0
  %v69 = vmax.f32 %v67, 0.0
  %v70 = vld [vmem:[%s3] sm:$0xff]
  %v71 = vld [vmem:[%s3 + $0x8] sm:$0xff]
  %v72 = vld [vmem:[%s3 + $0x10] sm:$0xff]
  %v73 = vld [vmem:[%s3 + $0x18] sm:$0xff]
  %v74 = vld [vmem:[%s4] sm:$0x1]
  %v76 = vperm.slane %v74, 0
  %vm78 = vcmask 261120
  %v80 = vsel %vm78, %v69, 0
  %82 = vmatpush.msra.mxu0 0.0
  %83 = vmatpush.msra.mxu0 0.0
  %84 = vmatpush.msra.mxu0 0.0
  %85 = vmatpush.msra.mxu0 0.0
  %86 = vmatpush.msra.mxu0 0.0
  %87 = vmatpush.msra.mxu0 0.0
  %88 = vmatpush.msra.mxu0 0.0
  %89 = vmatpush.msra.mxu0 0.0
  %90 = vmatpush.msra.mxu0 0.0
  %91 = vmatpush.msra.mxu0 0.0
  %92 = vmatpush.msra.mxu0 0.0
  %93 = vmatpush.msra.mxu0 0.0
  %94 = vmatpush.msra.mxu0 %v73
  %95 = vmatpush.msra.mxu0 %v72
  %96 = vmatpush.msra.mxu0 %v71
  %97 = vmatpush.msra.mxu0 %v70
  %98 = vmatmul.f32.gmra.mxu0 %v80
  %v99 = vpop.f32.mrf.mxu0
  %v100 = vadd.f32 %v76, %v99
  %101 = vdwg.mxu0
  %v102 = vmax.f32 %v100, 0.0
  %v103 = vld [vmem:[%s5] sm:$0xff]
  %v104 = vld [vmem:[%s5 + $0x8] sm:$0xff]
  %v105 = vld [vmem:[%s5 + $0x10] sm:$0xff]
  %v106 = vld [vmem:[%s5 + $0x18] sm:$0xff]
  %v107 = vld [vmem:[%s6] sm:$0x3]
  %v109 = vperm.slane %v107, 0
  %v110 = vperm.slane %v107, 1
  %vm113 = vcmask 130048
  %v115 = vsel %vm113, %v102, 0
  %117 = vmatpush.msra.mxu0 0.0
  %118 = vmatpush.msra.mxu0 0.0
  %119 = vmatpush.msra.mxu0 0.0
  %120 = vmatpush.msra.mxu0 0.0
  %121 = vmatpush.msra.mxu0 0.0
  %122 = vmatpush.msra.mxu0 0.0
  %123 = vmatpush.msra.mxu0 0.0
  %124 = vmatpush.msra.mxu0 0.0
  %125 = vmatpush.msra.mxu0 0.0
  %126 = vmatpush.msra.mxu0 0.0
  %127 = vmatpush.msra.mxu0 0.0
  %128 = vmatpush.msra.mxu0 0.0
  %129 = vmatpush.msra.mxu0 0.0
  %130 = vmatpush.msra.mxu0 0.0
  %131 = vmatpush.msra.mxu0 %v105
  %132 = vmatpush.msra.mxu0 %v103
  %133 = vmatmul.f32.gmra.mxu0 %v115
  %v134 = vpop.f32.mrf.mxu0
  %v135 = vadd.f32 %v109, %v134
  %136 = vdwg.mxu0
  %137 = vmatpush.msra.mxu0 0.0
  %138 = vmatpush.msra.mxu0 0.0
  %139 = vmatpush.msra.mxu0 0.0
  %140 = vmatpush.msra.mxu0 0.0
  %141 = vmatpush.msra.mxu0 0.0
  %142 = vmatpush.msra.mxu0 0.0
  %143 = vmatpush.msra.mxu0 0.0
  %144 = vmatpush.msra.mxu0 0.0
  %145 = vmatpush.msra.mxu0 0.0
  %146 = vmatpush.msra.mxu0 0.0
  %147 = vmatpush.msra.mxu0 0.0
  %148 = vmatpush.msra.mxu0 0.0
  %149 = vmatpush.msra.mxu0 0.0
  %150 = vmatpush.msra.mxu0 0.0
  %151 = vmatpush.msra.mxu0 %v106
  %152 = vmatpush.msra.mxu0 %v104
  %153 = vmatmul.f32.gmra.mxu0 %v115
  %v154 = vpop.f32.mrf.mxu0
  %v155 = vadd.f32 %v110, %v154
  %156 = vdwg.mxu0
  %v157 = vld [vmem:[%s7] sm:$0x3]
  %v159 = vperm.slane %v157, 0
  %v160 = vperm.slane %v157, 1
  %v163 = vmax.f32 %v135, %v159
  %v164 = vmax.f32 %v155, %v160
  %v165 = vld [vmem:[%s8] sm:$0x3]
  %v167 = vperm.slane %v165, 0
  %v168 = vperm.slane %v165, 1
  %v171 = vmin.f32 %v163, %v167
  %v172 = vmin.f32 %v164, %v168
  %173 = vst [vmem:[%s9] sm:$0xff] %v171
  %174 = vst [vmem:[%s9 + $0x8] sm:$0xff] %v172
  // Predicated region
  $region38: #{gaussian_policy_forward.1} parent=0 // pred_check
    _
  $region39: #{gaussian_policy_forward.1} parent=0 // pred_check_branch
    %176 = sbr.rel (0) target = $region41
  $region40: #{gaussian_policy_forward.1} parent=0 // pred_region
    _
  $region41: #{gaussian_policy_forward.1} parent=0 // pred_fallthru
    _
  // Predicated region
  $region42: #{gaussian_policy_forward.1} parent=0 // pred_check
    _
  $region43: #{gaussian_policy_forward.1} parent=0 // pred_check_branch
    %178 = sbr.rel (0) target = $region45
  $region44: #{gaussian_policy_forward.1} parent=0 // pred_region
    _
  $region45: #{gaussian_policy_forward.1} parent=0 // pred_fallthru
    _

</llo_original>
